<compile_context>
chip_gen: v7x
topology: tpu7x:2x2x1
jax: 0.10.0
libtpu: 0.0.40
codegen_flags: <defaults>
</compile_context>

<pallas_src>
import numpy as np
import jax
import jax.numpy as jnp
from jax import lax
from jax.experimental import pallas as pl
from jax.experimental.pallas import tpu as pltpu


# ----------------------------- lane packing ---------------------------------
# lane(x, c) = (x % 2) * (W//2)*C + (x//2)*C + c
# Even pixels occupy the first half of the lanes, odd pixels the second half
# (channels minor).  The 2x2 maxpool's column reduction then becomes a single
# elementwise max of the two lane halves, already compacted in (x/2, c) order.

def _lane0(x, c_count, w):
    return (x % 2) * ((w // 2) * c_count) + (x // 2) * c_count


def pack_params(params, w):
    """One-time packing (hoisted out of forward): fold the 1x1 conv into a
    block-diagonal matrix and each 3x3 conv into a banded (3*L, L) matrix that
    absorbs the dx shifts, the x zero-padding and the channel mixing."""
    f32 = np.float32
    c1 = np.asarray(params["c1_w"], f32)[:, :, 0, 0]          # (cout, cin)
    cout, cin = c1.shape
    lin, L = w * cin, w * cout

    w1 = np.zeros((lin, L), f32)
    b1 = np.zeros((1, L), f32)
    c1b = np.asarray(params["c1_b"], f32)
    for x in range(w):
        li, lo = _lane0(x, cin, w), _lane0(x, cout, w)
        w1[li:li + cin, lo:lo + cout] = c1.T                  # [ci, co]
        b1[0, lo:lo + cout] = c1b

    def band3x3(wname, bname):
        wt = np.asarray(params[wname], f32)                   # (co, ci, 3, 3)
        co_n, ci_n = wt.shape[0], wt.shape[1]
        wb = np.zeros((3 * L, L), f32)
        bb = np.zeros((1, L), f32)
        bv = np.asarray(params[bname], f32)
        for ky in range(3):
            for kx in range(3):
                blk = wt[:, :, ky, kx].T                      # (ci, co)
                for xo in range(w):
                    xi = xo + kx - 1
                    if 0 <= xi < w:                           # x zero-padding
                        ri = ky * L + _lane0(xi, ci_n, w)
                        co = _lane0(xo, co_n, w)
                        wb[ri:ri + ci_n, co:co + co_n] = blk
        for x in range(w):
            lo = _lane0(x, co_n, w)
            bb[0, lo:lo + co_n] = bv
        return jnp.asarray(wb), jnp.asarray(bb)

    wd1, bd1 = band3x3("d1_w", "d1_b")
    wd2, bd2 = band3x3("d2_w", "d2_b")
    return dict(w1=jnp.asarray(w1), b1=jnp.asarray(b1),
                wd1=wd1, bd1=bd1, wd2=wd2, bd2=bd2,
                cout=int(cout), cin=int(cin), w=int(w))


# ----------------------------- fused Pallas kernel --------------------------

def _make_kernel(tile_h, h, w, cin, cout):
    lin = w * cin
    L = w * cout
    half = L // 2
    r0 = tile_h + 4            # i_drb rows (2-row halo each side)
    r1 = tile_h + 2            # h1 rows    (1-row halo each side)
    r2 = tile_h                # o_drb rows (this tile only)

    def kernel(x_ref, w1_ref, b1_ref, wd1_ref, bd1_ref, wd2_ref, bd2_ref,
               o_ref):
        t = pl.program_id(1)

        # ---- c1: 1x1 conv as one block-diagonal matmul + bias ---------------
        x = x_ref[0, 0, :, :]                                   # (r0, lin)
        i_drb = jnp.dot(x, w1_ref[...],
                        preferred_element_type=jnp.float32) + b1_ref[...]
        # Rows outside the image only exist as the zero padding of the 3x3
        # convs -> zero them.  Mask built in-kernel from iota (no mask DMA).
        g0 = t * tile_h - 2 + lax.broadcasted_iota(jnp.int32, (r0, L), 0)
        i_drb = jnp.where((g0 >= 0) & (g0 < h), i_drb, 0.0)

        # ---- DRB conv1: ONE matmul (K = 3L), local accumulator, no scratch --
        a1 = jnp.concatenate(
            [i_drb[0:r1], i_drb[1:r1 + 1], i_drb[2:r1 + 2]], axis=1)  # (r1,3L)
        s1 = jnp.dot(a1, wd1_ref[...],
                     preferred_element_type=jnp.float32) + bd1_ref[...]
        g1 = t * tile_h - 1 + lax.broadcasted_iota(jnp.int32, (r1, L), 0)
        h1 = jnp.where((g1 >= 0) & (g1 < h), jnp.maximum(s1, 0.0), 0.0)

        # ---- DRB conv2 + bias + residual skip + ReLU: ONE matmul ------------
        a2 = jnp.concatenate(
            [h1[0:r2], h1[1:r2 + 1], h1[2:r2 + 2]], axis=1)           # (r2,3L)
        s2 = jnp.dot(a2, wd2_ref[...],
                     preferred_element_type=jnp.float32) + bd2_ref[...]
        o_drb = jnp.maximum(s2 + i_drb[2:2 + r2], 0.0)                # (r2, L)

        # ---- Dropout2d (eval) = identity ------------------------------------
        # TODO(synk): training-mode Dropout2d (channel masks, 1/(1-p)) omitted.

        # ---- fused MaxPool2d(2,2) --------------------------------------------
        # rows: sublane pair max; columns: even/odd lane-half max (the lane
        # packing puts pooling partners exactly half the lanes apart and the
        # result lands compacted in (x_pooled, channel) order).
        o3 = o_drb.reshape(r2 // 2, 2, L)
        rowmax = jnp.maximum(o3[:, 0, :], o3[:, 1, :])          # (r2//2, L)
        pooled = jnp.maximum(rowmax[:, :half], rowmax[:, half:])  # (r2//2, L/2)
        # Post-pool ReLU is a mathematical no-op (o_drb >= 0): skipped.
        o_ref[0, 0, :, :] = pooled

    return kernel


# ----------------------------- forward wrapper -------------------------------

def downsample_forward(x_nchw, packed, *, tile_h=8):
    n, cin, h, w = x_nchw.shape
    cout = packed["cout"]
    assert cin == packed["cin"] and w == packed["w"]
    assert h % 2 == 0 and w % 2 == 0
    tile_h = min(tile_h, h)
    assert h % tile_h == 0 and tile_h % 2 == 0
    n_tiles = h // tile_h
    lin, L = w * cin, w * cout
    half = L // 2

    # NCHW -> lane-packed rows (even pixels first, then odd, channels minor).
    x_nhwc = jnp.transpose(x_nchw, (0, 2, 3, 1)).astype(jnp.float32)
    x_eo = jnp.concatenate([x_nhwc[:, :, 0::2, :], x_nhwc[:, :, 1::2, :]],
                           axis=2)
    x_rows = x_eo.reshape(n, h, lin)

    # Pre-duplicate halo rows so a plain BlockSpec tiles the input: the VMEM
    # working set is O(tile_h) and the input DMA pipelines per grid step.
    x_pad = jnp.pad(x_rows, ((0, 0), (2, 2), (0, 0)))
    ridx = (jnp.arange(n_tiles)[:, None] * tile_h
            + jnp.arange(tile_h + 4)[None, :])
    x_tiles = x_pad[:, ridx, :]                  # (n, n_tiles, tile_h+4, lin)

    kernel = _make_kernel(tile_h, h, w, cin, cout)

    out = pl.pallas_call(
        kernel,
        out_shape=jax.ShapeDtypeStruct((n, n_tiles, tile_h // 2, half),
                                       jnp.float32),
        grid=(n, n_tiles),
        in_specs=[
            pl.BlockSpec((1, 1, tile_h + 4, lin), lambda i, t: (i, t, 0, 0)),
            pl.BlockSpec((lin, L), lambda i, t: (0, 0)),         # w1 (blockdiag)
            pl.BlockSpec((1, L), lambda i, t: (0, 0)),           # b1
            pl.BlockSpec((3 * L, L), lambda i, t: (0, 0)),       # wd1 (banded)
            pl.BlockSpec((1, L), lambda i, t: (0, 0)),           # bd1
            pl.BlockSpec((3 * L, L), lambda i, t: (0, 0)),       # wd2 (banded)
            pl.BlockSpec((1, L), lambda i, t: (0, 0)),           # bd2
        ],
        out_specs=pl.BlockSpec((1, 1, tile_h // 2, half),
                               lambda i, t: (i, t, 0, 0)),
        compiler_params=pltpu.CompilerParams(
            dimension_semantics=("parallel", "parallel"),
            # Per-step working set is < 1 MB; 32 MiB is within every
            # generation's scoped budget (incl. v7x's 64 MiB/TC).
            vmem_limit_bytes=32 * 1024 * 1024),
    )(x_tiles, packed["w1"], packed["b1"], packed["wd1"], packed["bd1"],
      packed["wd2"], packed["bd2"])

    # Pooled lanes are already compact in (x_pooled, channel) order.
    out = out.reshape(n, h // 2, w // 2, cout)
    return jnp.transpose(out, (0, 3, 1, 2))      # back to NCHW


# ----------------------------- reference (pure JAX) --------------------------

def _reference(x, params):
    def conv2d(x_, w_, b_, pad):
        y = lax.conv_general_dilated(
            x_, w_, (1, 1), [(pad, pad), (pad, pad)],
            dimension_numbers=("NCHW", "OIHW", "NCHW"))
        return y + b_[None, :, None, None]

    i_drb = conv2d(x, params["c1_w"], params["c1_b"], 0)
    h1 = jnp.maximum(conv2d(i_drb, params["d1_w"], params["d1_b"], 1), 0.0)
    o_drb = jnp.maximum(conv2d(h1, params["d2_w"], params["d2_b"], 1) + i_drb,
                        0.0)
    n, c, hh, ww = o_drb.shape
    pooled = o_drb.reshape(n, c, hh // 2, 2, ww // 2, 2).max(axis=(3, 5))
    return jnp.maximum(pooled, 0.0)


# ----------------------------- main -----------------------------------------

if __name__ == "__main__":
    N, Cin, Cout, H, W = 2, 4, 8, 16, 16

    key = jax.random.PRNGKey(0)
    k = jax.random.split(key, 8)
    params = {
        "c1_w": 0.1 * jax.random.normal(k[0], (Cout, Cin, 1, 1), jnp.float32),
        "c1_b": 0.1 * jax.random.normal(k[1], (Cout,), jnp.float32),
        "d1_w": 0.1 * jax.random.normal(k[2], (Cout, Cout, 3, 3), jnp.float32),
        "d1_b": 0.1 * jax.random.normal(k[3], (Cout,), jnp.float32),
        "d2_w": 0.1 * jax.random.normal(k[4], (Cout, Cout, 3, 3), jnp.float32),
        "d2_b": 0.1 * jax.random.normal(k[5], (Cout,), jnp.float32),
    }
    x = jax.random.normal(k[6], (N, Cin, H, W), jnp.float32)

    packed = pack_params(params, W)              # one-time weight packing
    fwd = jax.jit(lambda xx: downsample_forward(xx, packed, tile_h=8))

    out = jax.block_until_ready(fwd(x))
    ref = jax.block_until_ready(_reference(x, params))

    assert out.shape == (N, Cout, H // 2, W // 2), out.shape
    assert jnp.allclose(out, ref, atol=1e-4, rtol=1e-4), \
        float(jnp.max(jnp.abs(out - ref)))

    print("KERNEL_OK")
</pallas_src>

<mosaic_0001>
module attributes {stable_mosaic.version = 11 : i64} {
  func.func @kernel(%arg0: i32, %arg1: i32, %arg2: memref<1x1x12x64xf32, #tpu.memory_space<vmem>>, %arg3: memref<64x128xf32, #tpu.memory_space<vmem>>, %arg4: memref<1x128xf32, #tpu.memory_space<vmem>>, %arg5: memref<384x128xf32, #tpu.memory_space<vmem>>, %arg6: memref<1x128xf32, #tpu.memory_space<vmem>>, %arg7: memref<384x128xf32, #tpu.memory_space<vmem>>, %arg8: memref<1x128xf32, #tpu.memory_space<vmem>>, %arg9: memref<1x1x4x64xf32, #tpu.memory_space<vmem>>) attributes {dimension_semantics = [#tpu.dimension_semantics<parallel>, #tpu.dimension_semantics<parallel>], iteration_bounds = array<i64: 2, 2>, scalar_prefetch = 0 : i64, scratch_operands = 0 : i64, tpu.core_type = #tpu.core_type<tc>, window_params = [{transform_indices = @transform_0, window_bounds = array<i64: 1, 1, 12, 64>}, {pipeline_mode = #tpu.pipeline_mode<synchronous>, transform_indices = @transform_1, window_bounds = array<i64: 64, 128>}, {pipeline_mode = #tpu.pipeline_mode<synchronous>, transform_indices = @transform_2, window_bounds = array<i64: 1, 128>}, {pipeline_mode = #tpu.pipeline_mode<synchronous>, transform_indices = @transform_3, window_bounds = array<i64: 384, 128>}, {pipeline_mode = #tpu.pipeline_mode<synchronous>, transform_indices = @transform_4, window_bounds = array<i64: 1, 128>}, {pipeline_mode = #tpu.pipeline_mode<synchronous>, transform_indices = @transform_5, window_bounds = array<i64: 384, 128>}, {pipeline_mode = #tpu.pipeline_mode<synchronous>, transform_indices = @transform_6, window_bounds = array<i64: 1, 128>}, {transform_indices = @transform_7, window_bounds = array<i64: 1, 1, 4, 64>}]} {
    %c0 = arith.constant 0 : index
    %c0_0 = arith.constant 0 : index
    %c0_1 = arith.constant 0 : index
    %c0_2 = arith.constant 0 : index
    %0 = vector.load %arg2[%c0, %c0_0, %c0_1, %c0_2] : memref<1x1x12x64xf32, #tpu.memory_space<vmem>>, vector<1x1x12x64xf32>
    %1 = vector.shape_cast %0 : vector<1x1x12x64xf32> to vector<12x64xf32>
    %c0_3 = arith.constant 0 : index
    %c0_4 = arith.constant 0 : index
    %2 = vector.load %arg3[%c0_3, %c0_4] : memref<64x128xf32, #tpu.memory_space<vmem>>, vector<64x128xf32>
    %cst = arith.constant dense<0.000000e+00> : vector<12x128xf32>
    %3 = tpu.matmul %1, %2, %cst {dimension_numbers = #tpu.dot_dimension_numbers<[1], [0], [0], [1], [0, 0, 1, 1], [], []>} : vector<12x64xf32>, vector<64x128xf32>, vector<12x128xf32> -> vector<12x128xf32>
    %c0_5 = arith.constant 0 : index
    %c0_6 = arith.constant 0 : index
    %4 = vector.load %arg4[%c0_5, %c0_6] : memref<1x128xf32, #tpu.memory_space<vmem>>, vector<1x128xf32>
    %5 = vector.broadcast %4 : vector<1x128xf32> to vector<12x128xf32>
    %6 = arith.addf %3, %5 : vector<12x128xf32>
    %c8_i32 = arith.constant 8 : i32
    %7 = arith.muli %arg1, %c8_i32 : i32
    %c2_i32 = arith.constant 2 : i32
    %8 = arith.subi %7, %c2_i32 : i32
    %9 = tpu.iota {dimensions = array<i32: 0>} : vector<12x128xi32>
    %10 = vector.broadcast %8 : i32 to vector<12x128xi32>
    %11 = arith.addi %10, %9 : vector<12x128xi32>
    %c0_i32 = arith.constant 0 : i32
    %12 = vector.broadcast %c0_i32 : i32 to vector<12x128xi32>
    %13 = arith.cmpi sge, %11, %12 : vector<12x128xi32>
    %c16_i32 = arith.constant 16 : i32
    %14 = vector.broadcast %c16_i32 : i32 to vector<12x128xi32>
    %15 = arith.cmpi slt, %11, %14 : vector<12x128xi32>
    %16 = arith.andi %13, %15 : vector<12x128xi1>
    %cst_7 = arith.constant 0.000000e+00 : f32
    %17 = vector.broadcast %cst_7 : f32 to vector<12x128xf32>
    %18 = arith.select %16, %6, %17 : vector<12x128xi1>, vector<12x128xf32>
    %19 = vector.extract_strided_slice %18 {offsets = [0, 0], sizes = [10, 128], strides = [1, 1]} : vector<12x128xf32> to vector<10x128xf32>
    %20 = vector.extract_strided_slice %18 {offsets = [1, 0], sizes = [10, 128], strides = [1, 1]} : vector<12x128xf32> to vector<10x128xf32>
    %21 = vector.extract_strided_slice %18 {offsets = [2, 0], sizes = [10, 128], strides = [1, 1]} : vector<12x128xf32> to vector<10x128xf32>
    %22 = tpu.concatenate %19, %20, %21 in 1 : vector<10x128xf32>, vector<10x128xf32>, vector<10x128xf32> -> vector<10x384xf32>
    %c0_8 = arith.constant 0 : index
    %c0_9 = arith.constant 0 : index
    %23 = vector.load %arg5[%c0_8, %c0_9] : memref<384x128xf32, #tpu.memory_space<vmem>>, vector<384x128xf32>
    %cst_10 = arith.constant dense<0.000000e+00> : vector<10x128xf32>
    %24 = tpu.matmul %22, %23, %cst_10 {dimension_numbers = #tpu.dot_dimension_numbers<[1], [0], [0], [1], [0, 0, 1, 1], [], []>} : vector<10x384xf32>, vector<384x128xf32>, vector<10x128xf32> -> vector<10x128xf32>
    %c0_11 = arith.constant 0 : index
    %c0_12 = arith.constant 0 : index
    %25 = vector.load %arg6[%c0_11, %c0_12] : memref<1x128xf32, #tpu.memory_space<vmem>>, vector<1x128xf32>
    %26 = vector.broadcast %25 : vector<1x128xf32> to vector<10x128xf32>
    %27 = arith.addf %24, %26 : vector<10x128xf32>
    %c8_i32_13 = arith.constant 8 : i32
    %28 = arith.muli %arg1, %c8_i32_13 : i32
    %c1_i32 = arith.constant 1 : i32
    %29 = arith.subi %28, %c1_i32 : i32
    %30 = tpu.iota {dimensions = array<i32: 0>} : vector<10x128xi32>
    %31 = vector.broadcast %29 : i32 to vector<10x128xi32>
    %32 = arith.addi %31, %30 : vector<10x128xi32>
    %c0_i32_14 = arith.constant 0 : i32
    %33 = vector.broadcast %c0_i32_14 : i32 to vector<10x128xi32>
    %34 = arith.cmpi sge, %32, %33 : vector<10x128xi32>
    %c16_i32_15 = arith.constant 16 : i32
    %35 = vector.broadcast %c16_i32_15 : i32 to vector<10x128xi32>
    %36 = arith.cmpi slt, %32, %35 : vector<10x128xi32>
    %37 = arith.andi %34, %36 : vector<10x128xi1>
    %cst_16 = arith.constant 0.000000e+00 : f32
    %38 = vector.broadcast %cst_16 : f32 to vector<10x128xf32>
    %39 = arith.maximumf %27, %38 : vector<10x128xf32>
    %cst_17 = arith.constant 0.000000e+00 : f32
    %40 = vector.broadcast %cst_17 : f32 to vector<10x128xf32>
    %41 = arith.select %37, %39, %40 : vector<10x128xi1>, vector<10x128xf32>
    %42 = vector.extract_strided_slice %41 {offsets = [0, 0], sizes = [8, 128], strides = [1, 1]} : vector<10x128xf32> to vector<8x128xf32>
    %43 = vector.extract_strided_slice %41 {offsets = [1, 0], sizes = [8, 128], strides = [1, 1]} : vector<10x128xf32> to vector<8x128xf32>
    %44 = vector.extract_strided_slice %41 {offsets = [2, 0], sizes = [8, 128], strides = [1, 1]} : vector<10x128xf32> to vector<8x128xf32>
    %45 = tpu.concatenate %42, %43, %44 in 1 : vector<8x128xf32>, vector<8x128xf32>, vector<8x128xf32> -> vector<8x384xf32>
    %c0_18 = arith.constant 0 : index
    %c0_19 = arith.constant 0 : index
    %46 = vector.load %arg7[%c0_18, %c0_19] : memref<384x128xf32, #tpu.memory_space<vmem>>, vector<384x128xf32>
    %cst_20 = arith.constant dense<0.000000e+00> : vector<8x128xf32>
    %47 = tpu.matmul %45, %46, %cst_20 {dimension_numbers = #tpu.dot_dimension_numbers<[1], [0], [0], [1], [0, 0, 1, 1], [], []>} : vector<8x384xf32>, vector<384x128xf32>, vector<8x128xf32> -> vector<8x128xf32>
    %c0_21 = arith.constant 0 : index
    %c0_22 = arith.constant 0 : index
    %48 = vector.load %arg8[%c0_21, %c0_22] : memref<1x128xf32, #tpu.memory_space<vmem>>, vector<1x128xf32>
    %49 = vector.broadcast %48 : vector<1x128xf32> to vector<8x128xf32>
    %50 = arith.addf %47, %49 : vector<8x128xf32>
    %51 = vector.extract_strided_slice %18 {offsets = [2, 0], sizes = [8, 128], strides = [1, 1]} : vector<12x128xf32> to vector<8x128xf32>
    %52 = arith.addf %50, %51 : vector<8x128xf32>
    %cst_23 = arith.constant 0.000000e+00 : f32
    %53 = vector.broadcast %cst_23 : f32 to vector<8x128xf32>
    %54 = arith.maximumf %52, %53 : vector<8x128xf32>
    %55 = vector.shape_cast %54 : vector<8x128xf32> to vector<4x2x128xf32>
    %56 = vector.extract_strided_slice %55 {offsets = [0, 0, 0], sizes = [4, 1, 128], strides = [1, 1, 1]} : vector<4x2x128xf32> to vector<4x1x128xf32>
    %57 = vector.shape_cast %56 : vector<4x1x128xf32> to vector<4x128xf32>
    %58 = vector.extract_strided_slice %55 {offsets = [0, 1, 0], sizes = [4, 1, 128], strides = [1, 1, 1]} : vector<4x2x128xf32> to vector<4x1x128xf32>
    %59 = vector.shape_cast %58 : vector<4x1x128xf32> to vector<4x128xf32>
    %60 = arith.maximumf %57, %59 : vector<4x128xf32>
    %61 = vector.extract_strided_slice %60 {offsets = [0, 0], sizes = [4, 64], strides = [1, 1]} : vector<4x128xf32> to vector<4x64xf32>
    %62 = vector.extract_strided_slice %60 {offsets = [0, 64], sizes = [4, 64], strides = [1, 1]} : vector<4x128xf32> to vector<4x64xf32>
    %63 = arith.maximumf %61, %62 : vector<4x64xf32>
    %c0_24 = arith.constant 0 : index
    %c0_25 = arith.constant 0 : index
    %c0_26 = arith.constant 0 : index
    %c0_27 = arith.constant 0 : index
    %64 = vector.load %arg9[%c0_24, %c0_25, %c0_26, %c0_27] : memref<1x1x4x64xf32, #tpu.memory_space<vmem>>, vector<1x1x4x64xf32>
    %65 = vector.shape_cast %64 : vector<1x1x4x64xf32> to vector<4x64xf32>
    %66 = vector.shape_cast %63 : vector<4x64xf32> to vector<1x1x4x64xf32>
    tpu.vector_store %arg9[%c0_24, %c0_25, %c0_26, %c0_27], %66 {strides = array<i32>} : memref<1x1x4x64xf32, #tpu.memory_space<vmem>>, vector<1x1x4x64xf32>,
    return
  }
  func.func @transform_0(%arg0: i32, %arg1: i32) -> (i32, i32, i32, i32) {
    %c0_i32 = arith.constant 0 : i32
    %c0_i32_0 = arith.constant 0 : i32
    %c0_i32_1 = arith.constant 0 : i32
    return %arg0, %arg1, %c0_i32, %c0_i32_0 : i32, i32, i32, i32
  }
  func.func @transform_1(%arg0: i32, %arg1: i32) -> (i32, i32) {
    %c0_i32 = arith.constant 0 : i32
    %c0_i32_0 = arith.constant 0 : i32
    %c0_i32_1 = arith.constant 0 : i32
    return %c0_i32, %c0_i32_0 : i32, i32
  }
  func.func @transform_2(%arg0: i32, %arg1: i32) -> (i32, i32) {
    %c0_i32 = arith.constant 0 : i32
    %c0_i32_0 = arith.constant 0 : i32
    %c0_i32_1 = arith.constant 0 : i32
    return %c0_i32, %c0_i32_0 : i32, i32
  }
  func.func @transform_3(%arg0: i32, %arg1: i32) -> (i32, i32) {
    %c0_i32 = arith.constant 0 : i32
    %c0_i32_0 = arith.constant 0 : i32
    %c0_i32_1 = arith.constant 0 : i32
    return %c0_i32, %c0_i32_0 : i32, i32
  }
  func.func @transform_4(%arg0: i32, %arg1: i32) -> (i32, i32) {
    %c0_i32 = arith.constant 0 : i32
    %c0_i32_0 = arith.constant 0 : i32
    %c0_i32_1 = arith.constant 0 : i32
    return %c0_i32, %c0_i32_0 : i32, i32
  }
  func.func @transform_5(%arg0: i32, %arg1: i32) -> (i32, i32) {
    %c0_i32 = arith.constant 0 : i32
    %c0_i32_0 = arith.constant 0 : i32
    %c0_i32_1 = arith.constant 0 : i32
    return %c0_i32, %c0_i32_0 : i32, i32
  }
  func.func @transform_6(%arg0: i32, %arg1: i32) -> (i32, i32) {
    %c0_i32 = arith.constant 0 : i32
    %c0_i32_0 = arith.constant 0 : i32
    %c0_i32_1 = arith.constant 0 : i32
    return %c0_i32, %c0_i32_0 : i32, i32
  }
  func.func @transform_7(%arg0: i32, %arg1: i32) -> (i32, i32, i32, i32) {
    %c0_i32 = arith.constant 0 : i32
    %c0_i32_0 = arith.constant 0 : i32
    %c0_i32_1 = arith.constant 0 : i32
    return %arg0, %arg1, %c0_i32, %c0_i32_0 : i32, i32, i32, i32
  }
}

</mosaic_0001>

<llo_original>
// kernel: _lambda_.1
$region0: #{_lambda_.1}
  #allocation0 [shape = 'u32[]', space=smem, size = 0x4, offset = 0x4, fixed_abs, tag = 'smem constant byte address 0x4 - core index']
  #allocation1 [shape = 'u32[144,128]{1,0:T(1,128)}', space=vmem, size = 0x12000, scoped, tag = 'internal scratch']
  %s0 = inlined_call_operand.vmem [shape: f32[2,2,12,64], index: 0, kind: input, shape index: {}]
  %s1 = inlined_call_operand.vmem [shape: f32[64,128], index: 1, kind: input, shape index: {}]
  %s2 = inlined_call_operand.vmem [shape: f32[1,128], index: 2, kind: input, shape index: {}]
  %s3 = inlined_call_operand.vmem [shape: f32[384,128], index: 3, kind: input, shape index: {}]
  %s4 = inlined_call_operand.vmem [shape: f32[1,128], index: 4, kind: input, shape index: {}]
  %s5 = inlined_call_operand.vmem [shape: f32[384,128], index: 5, kind: input, shape index: {}]
  %s6 = inlined_call_operand.vmem [shape: f32[1,128], index: 6, kind: input, shape index: {}]
  %s7 = inlined_call_operand.vmem [shape: f32[2,2,4,64], index: 7, kind: output, shape index: {}]
  %s8 = sld [smem:[#allocation0]]
  $region61: #{_lambda_.1} parent=0
    _
  %s10 = ssub.s32 1, %s8
  %s11 = scalar_select 0, %s10, %s8
  loop: start=0, step=1, limit=6
  $region2: #{_lambda_.1} parent=0 // loop_pre_header
    _
  $region3: #{_lambda_.1} parent=0 // loop_header
    %s13 = sphi 0, %s17
    %p14 = scmp.ge.s32.totalorder %s13, 6
    %s20 = sphi 0, %s32
    %s21 = sphi 0, %s28
    %s22 = sphi 0, %s20
    %s23 = sphi 0, %s21
    %s24 = sphi 0, %s22
    %s25 = sphi 0, %s23
    %s37 = sphi 0, %s39
    %s40 = sphi 0, %s37
    %s41 = sphi 0, %s40
    %s57 = sphi 0, %s41
    %s61 = sphi 0, %s61
    %s63 = sphi 0, %s61
    %s64 = sphi 0, %s63
    %s78 = sphi 0, %s64
    %s82 = sphi 0, %s82
    %s84 = sphi 0, %s82
    %s85 = sphi 0, %s84
    %s99 = sphi 0, %s85
    %s103 = sphi 0, %s103
    %s105 = sphi 0, %s103
    %s106 = sphi 0, %s105
    %s120 = sphi 0, %s106
    %s124 = sphi 0, %s124
    %s126 = sphi 0, %s124
    %s127 = sphi 0, %s126
    %s141 = sphi 0, %s127
    %s145 = sphi 0, %s145
    %s147 = sphi 0, %s145
    %s148 = sphi 0, %s147
    %s162 = sphi 0, %s148
    %s166 = sphi 0, %s166
    %s168 = sphi 0, %s166
    %s169 = sphi 0, %s168
    %s183 = sphi 0, %s169
    %s191 = sphi 0, %s193
    %s194 = sphi 0, %s191
    %s195 = sphi 0, %s194
    %s211 = sphi 0, %s195
  $region4: #{_lambda_.1} parent=0 // loop_header_branch
    %16 = sbr.rel (%p14) target = $region8
  $region5: #{_lambda_.1} parent=0 // loop_body
    %s18 = ssub.s32 %s13, 1
    %s19 = ssub.s32 %s13, 2
    %s26 = sadd.s32 1, %s21
    %p27 = scmp.ge.s32.totalorder %s26, 2
    %s28 = scalar_select %p27, 0, %s26
    %s29 = sadd.s32 1, %s20
    %s30 = scalar_select %p27, %s29, %s20
    %p31 = scmp.ge.s32.totalorder %s30, 2
    %s32 = scalar_select %p31, 0, %s30
    %s33 = ssub.s32 %s20, %s32
    %s34 = ssub.s32 %s21, %s28
    %s35 = sor.u32 %s33, %s34
    %p36 = scmp.eq.s32.totalorder %s35, 0
    %s38 = sadd.s32 %s37, 1
    %s39 = scalar_select %p36, %s37, %s38
    %p42 = pneg %p36
    %p43 = scmp.eq.s32.totalorder %s13, 3
    %p44 = por %p42, %p43
    %p45 = scmp.ne.s32.totalorder %s37, %s40
    %p46 = scmp.eq.s32.totalorder %s13, 0
    %p47 = por %p45, %p46
    %p48 = scmp.ne.s32.totalorder %s37, %s40
    %p49 = scmp.eq.s32.totalorder %s18, 3
    %p50 = por %p48, %p49
    %p51 = scmp.ne.s32.totalorder %s40, %s41
    %p52 = scmp.eq.s32.totalorder %s18, 0
    %p53 = por %p51, %p52
    %p54 = scmp.ne.s32.totalorder %s40, %s41
    %p55 = scmp.eq.s32.totalorder %s19, 3
    %p56 = por %p54, %p55
    %p58 = scmp.ne.s32.totalorder %s41, %s57
    %p59 = scmp.eq.s32.totalorder %s19, 0
    %p60 = por %p58, %p59
    %s62 = sadd.s32 %s61, 1
    %p65 = scmp.eq.s32.totalorder %s13, 3
    %p66 = scmp.ne.s32.totalorder %s61, %s63
    %p67 = scmp.eq.s32.totalorder %s13, 0
    %p68 = por %p66, %p67
    %p69 = scmp.ne.s32.totalorder %s61, %s63
    %p70 = scmp.eq.s32.totalorder %s18, 3
    %p71 = por %p69, %p70
    %p72 = scmp.ne.s32.totalorder %s63, %s64
    %p73 = scmp.eq.s32.totalorder %s18, 0
    %p74 = por %p72, %p73
    %p75 = scmp.ne.s32.totalorder %s63, %s64
    %p76 = scmp.eq.s32.totalorder %s19, 3
    %p77 = por %p75, %p76
    %p79 = scmp.ne.s32.totalorder %s64, %s78
    %p80 = scmp.eq.s32.totalorder %s19, 0
    %p81 = por %p79, %p80
    %s83 = sadd.s32 %s82, 1
    %p86 = scmp.eq.s32.totalorder %s13, 3
    %p87 = scmp.ne.s32.totalorder %s82, %s84
    %p88 = scmp.eq.s32.totalorder %s13, 0
    %p89 = por %p87, %p88
    %p90 = scmp.ne.s32.totalorder %s82, %s84
    %p91 = scmp.eq.s32.totalorder %s18, 3
    %p92 = por %p90, %p91
    %p93 = scmp.ne.s32.totalorder %s84, %s85
    %p94 = scmp.eq.s32.totalorder %s18, 0
    %p95 = por %p93, %p94
    %p96 = scmp.ne.s32.totalorder %s84, %s85
    %p97 = scmp.eq.s32.totalorder %s19, 3
    %p98 = por %p96, %p97
    %p100 = scmp.ne.s32.totalorder %s85, %s99
    %p101 = scmp.eq.s32.totalorder %s19, 0
    %p102 = por %p100, %p101
    %s104 = sadd.s32 %s103, 1
    %p107 = scmp.eq.s32.totalorder %s13, 3
    %p108 = scmp.ne.s32.totalorder %s103, %s105
    %p109 = scmp.eq.s32.totalorder %s13, 0
    %p110 = por %p108, %p109
    %p111 = scmp.ne.s32.totalorder %s103, %s105
    %p112 = scmp.eq.s32.totalorder %s18, 3
    %p113 = por %p111, %p112
    %p114 = scmp.ne.s32.totalorder %s105, %s106
    %p115 = scmp.eq.s32.totalorder %s18, 0
    %p116 = por %p114, %p115
    %p117 = scmp.ne.s32.totalorder %s105, %s106
    %p118 = scmp.eq.s32.totalorder %s19, 3
    %p119 = por %p117, %p118
    %p121 = scmp.ne.s32.totalorder %s106, %s120
    %p122 = scmp.eq.s32.totalorder %s19, 0
    %p123 = por %p121, %p122
    %s125 = sadd.s32 %s124, 1
    %p128 = scmp.eq.s32.totalorder %s13, 3
    %p129 = scmp.ne.s32.totalorder %s124, %s126
    %p130 = scmp.eq.s32.totalorder %s13, 0
    %p131 = por %p129, %p130
    %p132 = scmp.ne.s32.totalorder %s124, %s126
    %p133 = scmp.eq.s32.totalorder %s18, 3
    %p134 = por %p132, %p133
    %p135 = scmp.ne.s32.totalorder %s126, %s127
    %p136 = scmp.eq.s32.totalorder %s18, 0
    %p137 = por %p135, %p136
    %p138 = scmp.ne.s32.totalorder %s126, %s127
    %p139 = scmp.eq.s32.totalorder %s19, 3
    %p140 = por %p138, %p139
    %p142 = scmp.ne.s32.totalorder %s127, %s141
    %p143 = scmp.eq.s32.totalorder %s19, 0
    %p144 = por %p142, %p143
    %s146 = sadd.s32 %s145, 1
    %p149 = scmp.eq.s32.totalorder %s13, 3
    %p150 = scmp.ne.s32.totalorder %s145, %s147
    %p151 = scmp.eq.s32.totalorder %s13, 0
    %p152 = por %p150, %p151
    %p153 = scmp.ne.s32.totalorder %s145, %s147
    %p154 = scmp.eq.s32.totalorder %s18, 3
    %p155 = por %p153, %p154
    %p156 = scmp.ne.s32.totalorder %s147, %s148
    %p157 = scmp.eq.s32.totalorder %s18, 0
    %p158 = por %p156, %p157
    %p159 = scmp.ne.s32.totalorder %s147, %s148
    %p160 = scmp.eq.s32.totalorder %s19, 3
    %p161 = por %p159, %p160
    %p163 = scmp.ne.s32.totalorder %s148, %s162
    %p164 = scmp.eq.s32.totalorder %s19, 0
    %p165 = por %p163, %p164
    %s167 = sadd.s32 %s166, 1
    %p170 = scmp.eq.s32.totalorder %s13, 3
    %p171 = scmp.ne.s32.totalorder %s166, %s168
    %p172 = scmp.eq.s32.totalorder %s13, 0
    %p173 = por %p171, %p172
    %p174 = scmp.ne.s32.totalorder %s166, %s168
    %p175 = scmp.eq.s32.totalorder %s18, 3
    %p176 = por %p174, %p175
    %p177 = scmp.ne.s32.totalorder %s168, %s169
    %p178 = scmp.eq.s32.totalorder %s18, 0
    %p179 = por %p177, %p178
    %p180 = scmp.ne.s32.totalorder %s168, %s169
    %p181 = scmp.eq.s32.totalorder %s19, 3
    %p182 = por %p180, %p181
    %p184 = scmp.ne.s32.totalorder %s169, %s183
    %p185 = scmp.eq.s32.totalorder %s19, 0
    %p186 = por %p184, %p185
    %s187 = ssub.s32 %s20, %s32
    %s188 = ssub.s32 %s21, %s28
    %s189 = sor.u32 %s187, %s188
    %p190 = scmp.eq.s32.totalorder %s189, 0
    %s192 = sadd.s32 %s191, 1
    %s193 = scalar_select %p190, %s191, %s192
    %p196 = pneg %p190
    %p197 = scmp.eq.s32.totalorder %s13, 3
    %p198 = por %p196, %p197
    %p199 = scmp.ne.s32.totalorder %s191, %s194
    %p200 = scmp.eq.s32.totalorder %s13, 0
    %p201 = por %p199, %p200
    %p202 = scmp.ne.s32.totalorder %s191, %s194
    %p203 = scmp.eq.s32.totalorder %s18, 3
    %p204 = por %p202, %p203
    %p205 = scmp.ne.s32.totalorder %s194, %s195
    %p206 = scmp.eq.s32.totalorder %s18, 0
    %p207 = por %p205, %p206
    %p208 = scmp.ne.s32.totalorder %s194, %s195
    %p209 = scmp.eq.s32.totalorder %s19, 3
    %p210 = por %p208, %p209
    %p212 = scmp.ne.s32.totalorder %s195, %s211
    %p213 = scmp.eq.s32.totalorder %s19, 0
    %p214 = por %p212, %p213
    %p215 = scmp.le.s32.totalorder 1, %s13
    %p216 = scmp.lt.s32.totalorder %s13, 5
    %p217 = pnand %p215, %p216
    %p218 = pneg %p217
    // Predicated region
    $region9: #{_lambda_.1} parent=5 // pred_check
      _
    $region10: #{_lambda_.1} parent=5 // pred_check_branch
      %220 = sbr.rel (%p217) target = $region12
    $region11: #{_lambda_.1} parent=5 // pred_region
      %s221 = ssub.s32 %s13, 1
      // Predicated region
      $region13: #{_lambda_.1} parent=11 // pred_check
        %p222 = pneg %p74
      $region14: #{_lambda_.1} parent=11 // pred_check_branch
        %224 = sbr.rel (%p222) target = $region16
      $region15: #{_lambda_.1} parent=11 // pred_region
        _
      $region16: #{_lambda_.1} parent=11 // pred_fallthru
        _
      // Predicated region
      $region17: #{_lambda_.1} parent=11 // pred_check
        %p225 = pneg %p95
      $region18: #{_lambda_.1} parent=11 // pred_check_branch
        %227 = sbr.rel (%p225) target = $region20
      $region19: #{_lambda_.1} parent=11 // pred_region
        _
      $region20: #{_lambda_.1} parent=11 // pred_fallthru
        _
      // Predicated region
      $region21: #{_lambda_.1} parent=11 // pred_check
        %p228 = pneg %p116
      $region22: #{_lambda_.1} parent=11 // pred_check_branch
        %230 = sbr.rel (%p228) target = $region24
      $region23: #{_lambda_.1} parent=11 // pred_region
        _
      $region24: #{_lambda_.1} parent=11 // pred_fallthru
        _
      // Predicated region
      $region25: #{_lambda_.1} parent=11 // pred_check
        %p231 = pneg %p137
      $region26: #{_lambda_.1} parent=11 // pred_check_branch
        %233 = sbr.rel (%p231) target = $region28
      $region27: #{_lambda_.1} parent=11 // pred_region
        _
      $region28: #{_lambda_.1} parent=11 // pred_fallthru
        _
      // Predicated region
      $region29: #{_lambda_.1} parent=11 // pred_check
        %p234 = pneg %p158
      $region30: #{_lambda_.1} parent=11 // pred_check_branch
        %236 = sbr.rel (%p234) target = $region32
      $region31: #{_lambda_.1} parent=11 // pred_region
        _
      $region32: #{_lambda_.1} parent=11 // pred_fallthru
        _
      // Predicated region
      $region33: #{_lambda_.1} parent=11 // pred_check
        %p237 = pneg %p179
      $region34: #{_lambda_.1} parent=11 // pred_check_branch
        %239 = sbr.rel (%p237) target = $region36
      $region35: #{_lambda_.1} parent=11 // pred_region
        _
      $region36: #{_lambda_.1} parent=11 // pred_fallthru
        _
    $region12: #{_lambda_.1} parent=5 // pred_fallthru
      _
    %p240 = scmp.lt.s32.totalorder %s13, 4
    // Predicated region
    $region37: #{_lambda_.1} parent=5 // pred_check
      %p241 = pneg %p240
    $region38: #{_lambda_.1} parent=5 // pred_check_branch
      %243 = sbr.rel (%p241) target = $region40
    $region39: #{_lambda_.1} parent=5 // pred_region
      // Predicated region
      $region41: #{_lambda_.1} parent=39 // pred_check
        %p244 = pneg %p47
      $region42: #{_lambda_.1} parent=39 // pred_check_branch
        %246 = sbr.rel (%p244) target = $region44
      $region43: #{_lambda_.1} parent=39 // pred_region
        %p247 = scmp.lt.s32.totalorder %s20, 1
        %s248 = scalar_select %p247, %s20, 1
        %p249 = scmp.lt.s32.totalorder %s21, 1
        %s250 = scalar_select %p249, %s21, 1
        %s251 = smul.addr %s250, 2
        %s252 = smul.addr %s248, 4
        %s253 = sadd.s32 %s251, %s252
        %s254 = smul.addr %s253, 8
        %s255 = scalar_lea.vmem %s0, %s254
      $region44: #{_lambda_.1} parent=39 // pred_fallthru
        _
    $region40: #{_lambda_.1} parent=5 // pred_fallthru
      _
    %p256 = scmp.le.s32.totalorder 1, %s13
    %p257 = scmp.lt.s32.totalorder %s13, 5
    %p258 = pnand %p256, %p257
    %p259 = pneg %p258
    // Predicated region
    $region45: #{_lambda_.1} parent=5 // pred_check
      _
    $region46: #{_lambda_.1} parent=5 // pred_check_branch
      %261 = sbr.rel (%p258) target = $region48
    $region47: #{_lambda_.1} parent=5 // pred_region
      %s262 = ssub.s32 %s13, 1
      %p263 = scmp.lt.s32.totalorder %s22, 1
      %s264 = scalar_select %p263, %s22, 1
      %p265 = scmp.lt.s32.totalorder %s23, 1
      %s266 = scalar_select %p265, %s23, 1
      %s267 = smul.addr %s266, 2
      %s268 = smul.addr %s264, 4
      %s269 = sadd.s32 %s267, %s268
      %s270 = smul.addr %s269, 8
      %s271 = scalar_lea.vmem %s0, %s270
      %p272 = pneg %p53
      %p273 = pneg %p50
      %p274 = pneg %p74
      %p275 = pneg %p71
      %p276 = pneg %p95
      %p277 = pneg %p92
      %p278 = pneg %p116
      %p279 = pneg %p113
      %p280 = pneg %p137
      %p281 = pneg %p134
      %p282 = pneg %p158
      %p283 = pneg %p155
      %p284 = pneg %p179
      %p285 = pneg %p176
      %p286 = pneg %p207
      %p287 = pneg %p204
      %p288 = scmp.lt.s32.totalorder %s22, 1
      %s289 = scalar_select %p288, %s22, 1
      %p290 = scmp.lt.s32.totalorder %s23, 1
      %s291 = scalar_select %p290, %s23, 1
      %s292 = smul.addr %s289, 2
      %s293 = sadd.s32 %s291, %s292
      %s294 = smul.addr %s293, 4
      %s295 = scalar_lea.vmem %s7, %s294
      %p296 = scmp.lt.s32.totalorder %s22, 1
      %s297 = scalar_select %p296, %s22, 1
      %p298 = scmp.lt.s32.totalorder %s23, 1
      %s299 = scalar_select %p298, %s23, 1
      %s300 = smul.addr %s299, 2
      %s301 = smul.addr %s297, 4
      %s302 = sadd.s32 %s300, %s301
      %s303 = smul.addr %s302, 8
      %s304 = scalar_lea.vmem %s0, %s303
      %p305 = scmp.lt.s32.totalorder %s22, 1
      %s306 = scalar_select %p305, %s22, 1
      %p307 = scmp.lt.s32.totalorder %s23, 1
      %s308 = scalar_select %p307, %s23, 1
      %s309 = smul.addr %s306, 2
      %s310 = sadd.s32 %s308, %s309
      %s311 = smul.addr %s310, 4
      %s312 = scalar_lea.vmem %s7, %s311
      %v313 = vld [vmem:[%s304] sm:$0xff]
      %v314 = vld [vmem:[%s304 + $0x8] sm:$0xf]
      %v315 = vld [vmem:[%s1] sm:$0xff]
      %v316 = vld [vmem:[%s1 + $0x8] sm:$0xff]
      %v317 = vld [vmem:[%s1 + $0x10] sm:$0xff]
      %v318 = vld [vmem:[%s1 + $0x18] sm:$0xff]
      %v319 = vld [vmem:[%s1 + $0x20] sm:$0xff]
      %v320 = vld [vmem:[%s1 + $0x28] sm:$0xff]
      %v321 = vld [vmem:[%s1 + $0x30] sm:$0xff]
      %v322 = vld [vmem:[%s1 + $0x38] sm:$0xff]
      %v323 = vld [vmem:[%s2] sm:$0x1]
      %v325 = vlaneseq
      %v326 = vshrl.u32 %v325, 7
      %v327 = vsub.s32 0, %v326
      %v328 = vrot.slane %v323, %v327
      %vm330 = vcmask 523264
      %v332 = vsel %vm330, %v313, 0
      %v335 = vsel %vm330, %v314, 0
      %337 = vmatprep.subr.mxu0 0.0
      %338 = vmatpush1.msra.mxu0 %v315
      %339 = vmatprep.subr.mxu0 0.0
      %340 = vmatpush1.msra.mxu0 %v316
      %341 = vmatprep.subr.mxu0 0.0
      %342 = vmatpush1.msra.mxu0 %v317
      %343 = vmatprep.subr.mxu0 0.0
      %344 = vmatpush1.msra.mxu0 %v318
      %345 = vmatprep.subr.mxu0 0.0
      %346 = vmatpush1.msra.mxu0 %v319
      %347 = vmatprep.subr.mxu0 0.0
      %348 = vmatpush1.msra.mxu0 %v320
      %349 = vmatprep.subr.mxu0 0.0
      %350 = vmatpush1.msra.mxu0 %v321
      %351 = vmatprep.subr.mxu0 0.0
      %352 = vmatpush1.msra.mxu0 %v322
      %353 = vmatprep.subr.mxu0 0.0
      %354 = vmatpush1.msra.mxu0 0.0
      %355 = vmatprep.subr.mxu0 0.0
      %356 = vmatpush1.msra.mxu0 0.0
      %357 = vmatprep.subr.mxu0 0.0
      %358 = vmatpush1.msra.mxu0 0.0
      %359 = vmatprep.subr.mxu0 0.0
      %360 = vmatpush1.msra.mxu0 0.0
      %361 = vmatprep.subr.mxu0 0.0
      %362 = vmatpush1.msra.mxu0 0.0
      %363 = vmatprep.subr.mxu0 0.0
      %364 = vmatpush1.msra.mxu0 0.0
      %365 = vmatprep.subr.mxu0 0.0
      %366 = vmatpush1.msra.mxu0 0.0
      %367 = vmatprep.subr.mxu0 0.0
      %368 = vmatpush1.msra.mxu0 0.0
      %369 = vmatprep.subr.mxu0 0.0
      %370 = vmatpush1.msra.mxu0 0.0
      %371 = vmatprep.subr.mxu0 0.0
      %372 = vmatpush1.msra.mxu0 0.0
      %373 = vmatprep.subr.mxu0 0.0
      %374 = vmatpush1.msra.mxu0 0.0
      %375 = vmatprep.subr.mxu0 0.0
      %376 = vmatpush1.msra.mxu0 0.0
      %377 = vmatprep.subr.mxu0 0.0
      %378 = vmatpush1.msra.mxu0 0.0
      %379 = vmatprep.subr.mxu0 0.0
      %380 = vmatpush1.msra.mxu0 0.0
      %381 = vmatprep.subr.mxu0 0.0
      %382 = vmatpush1.msra.mxu0 0.0
      %383 = vmatprep.subr.mxu0 0.0
      %384 = vmatpush1.msra.mxu0 0.0
      %385 = vmatprep.subr.mxu0 0.0
      %386 = vmatpush1.msra.mxu0 0.0
      %387 = vmatprep.subr.mxu0 0.0
      %388 = vmatpush1.msra.mxu0 0.0
      %389 = vmatprep.subr.mxu0 0.0
      %390 = vmatpush1.msra.mxu0 0.0
      %391 = vmatprep.subr.mxu0 0.0
      %392 = vmatpush1.msra.mxu0 0.0
      %393 = vmatprep.subr.mxu0 0.0
      %394 = vmatpush1.msra.mxu0 0.0
      %395 = vmatprep.subr.mxu0 0.0
      %396 = vmatpush1.msra.mxu0 0.0
      %397 = vmatprep.subr.mxu0 0.0
      %398 = vmatpush1.msra.mxu0 0.0
      %399 = vmatprep.subr.mxu0 0.0
      %400 = vmatpush1.msra.mxu0 0.0
      %401 = vmatprep.mubr.f32.mxu0 0.0
      %402 = vmatmul.mubr.f32.gmra.mrb[0].mxu0 %v332
      %v403 = vpop.f32.mrb[0].mxu0
      %v404 = vadd.f32 %v328, %v403
      %v405 = vpop.f32.mrb[0].mxu0
      %406 = vmatprep.mubr.f32.mxu0 0.0
      %407 = vmatmul.mubr.f32.gmra.mrb[0].mxu0 %v335
      %v408 = vpop.f32.mrb[0].mxu0
      %v409 = vadd.f32 %v328, %v408
      %v410 = vpop.f32.mrb[0].mxu0
      %411 = vdwg.mxu0
      %s412 = smul.u32 %s23, 8
      %s413 = ssub.s32 %s412, 2
      %v414 = vlaneseq
      %v415 = vshrl.u32 %v414, 7
      %v416 = vadd.s32 %v415, 8
      %v417 = vstv %s413
      %v418 = vadd.s32 %v417, %v415
      %v419 = vadd.s32 %v417, %v416
      %vm420 = vcmp.ge.s32.totalorder %v418, 0
      %vm421 = vcmp.ge.s32.totalorder %v419, 0
      %vm422 = vcmp.lt.s32.totalorder %v418, 16
      %vm423 = vcmp.lt.s32.totalorder %v419, 16
      %vm424 = vmand %vm420, %vm422
      %vm425 = vmand %vm421, %vm423
      %v426 = vsel %vm424, %v404, 0.0
      %v427 = vsel %vm425, %v409, 0.0
      %vm430 = vcmask 1046528
      %v431 = vrot.slane %v426, 1
      %v432 = vrot.slane %v427, 1
      %v433 = vsel %vm430, %v431, %v432
      %vm436 = vcmask 1045504
      %v437 = vrot.slane %v426, 2
      %v438 = vrot.slane %v427, 2
      %v439 = vsel %vm436, %v437, %v438
      %v442 = vld [vmem:[%s3] sm:$0xff]
      %v443 = vld [vmem:[%s3 + $0x8] sm:$0xff]
      %v444 = vld [vmem:[%s3 + $0x10] sm:$0xff]
      %v445 = vld [vmem:[%s3 + $0x18] sm:$0xff]
      %v446 = vld [vmem:[%s3 + $0x20] sm:$0xff]
      %v447 = vld [vmem:[%s3 + $0x28] sm:$0xff]
      %v448 = vld [vmem:[%s3 + $0x30] sm:$0xff]
      %v449 = vld [vmem:[%s3 + $0x38] sm:$0xff]
      %v450 = vld [vmem:[%s3 + $0x40] sm:$0xff]
      %v451 = vld [vmem:[%s3 + $0x48] sm:$0xff]
      %v452 = vld [vmem:[%s3 + $0x50] sm:$0xff]
      %v453 = vld [vmem:[%s3 + $0x58] sm:$0xff]
      %v454 = vld [vmem:[%s3 + $0x60] sm:$0xff]
      %v455 = vld [vmem:[%s3 + $0x68] sm:$0xff]
      %v456 = vld [vmem:[%s3 + $0x70] sm:$0xff]
      %v457 = vld [vmem:[%s3 + $0x78] sm:$0xff]
      %v458 = vld [vmem:[%s3 + $0x80] sm:$0xff]
      %v459 = vld [vmem:[%s3 + $0x88] sm:$0xff]
      %v460 = vld [vmem:[%s3 + $0x90] sm:$0xff]
      %v461 = vld [vmem:[%s3 + $0x98] sm:$0xff]
      %v462 = vld [vmem:[%s3 + $0xa0] sm:$0xff]
      %v463 = vld [vmem:[%s3 + $0xa8] sm:$0xff]
      %v464 = vld [vmem:[%s3 + $0xb0] sm:$0xff]
      %v465 = vld [vmem:[%s3 + $0xb8] sm:$0xff]
      %v466 = vld [vmem:[%s3 + $0xc0] sm:$0xff]
      %v467 = vld [vmem:[%s3 + $0xc8] sm:$0xff]
      %v468 = vld [vmem:[%s3 + $0xd0] sm:$0xff]
      %v469 = vld [vmem:[%s3 + $0xd8] sm:$0xff]
      %v470 = vld [vmem:[%s3 + $0xe0] sm:$0xff]
      %v471 = vld [vmem:[%s3 + $0xe8] sm:$0xff]
      %v472 = vld [vmem:[%s3 + $0xf0] sm:$0xff]
      %v473 = vld [vmem:[%s3 + $0xf8] sm:$0xff]
      %v474 = vld [vmem:[%s3 + $0x100] sm:$0xff]
      %v475 = vld [vmem:[%s3 + $0x108] sm:$0xff]
      %v476 = vld [vmem:[%s3 + $0x110] sm:$0xff]
      %v477 = vld [vmem:[%s3 + $0x118] sm:$0xff]
      %v478 = vld [vmem:[%s3 + $0x120] sm:$0xff]
      %v479 = vld [vmem:[%s3 + $0x128] sm:$0xff]
      %v480 = vld [vmem:[%s3 + $0x130] sm:$0xff]
      %v481 = vld [vmem:[%s3 + $0x138] sm:$0xff]
      %v482 = vld [vmem:[%s3 + $0x140] sm:$0xff]
      %v483 = vld [vmem:[%s3 + $0x148] sm:$0xff]
      %v484 = vld [vmem:[%s3 + $0x150] sm:$0xff]
      %v485 = vld [vmem:[%s3 + $0x158] sm:$0xff]
      %v486 = vld [vmem:[%s3 + $0x160] sm:$0xff]
      %v487 = vld [vmem:[%s3 + $0x168] sm:$0xff]
      %v488 = vld [vmem:[%s3 + $0x170] sm:$0xff]
      %v489 = vld [vmem:[%s3 + $0x178] sm:$0xff]
      %v490 = vld [vmem:[%s4] sm:$0x1]
      %v492 = vlaneseq
      %v493 = vshrl.u32 %v492, 7
      %v494 = vsub.s32 0, %v493
      %v495 = vrot.slane %v490, %v494
      %497 = vmatprep.subr.mxu0 0.0
      %498 = vmatpush1.msra.mxu0 %v442
      %499 = vmatprep.subr.mxu0 0.0
      %500 = vmatpush1.msra.mxu0 %v443
      %501 = vmatprep.subr.mxu0 0.0
      %502 = vmatpush1.msra.mxu0 %v444
      %503 = vmatprep.subr.mxu0 0.0
      %504 = vmatpush1.msra.mxu0 %v445
      %505 = vmatprep.subr.mxu0 0.0
      %506 = vmatpush1.msra.mxu0 %v446
      %507 = vmatprep.subr.mxu0 0.0
      %508 = vmatpush1.msra.mxu0 %v447
      %509 = vmatprep.subr.mxu0 0.0
      %510 = vmatpush1.msra.mxu0 %v448
      %511 = vmatprep.subr.mxu0 0.0
      %512 = vmatpush1.msra.mxu0 %v449
      %513 = vmatprep.subr.mxu0 0.0
      %514 = vmatpush1.msra.mxu0 %v450
      %515 = vmatprep.subr.mxu0 0.0
      %516 = vmatpush1.msra.mxu0 %v451
      %517 = vmatprep.subr.mxu0 0.0
      %518 = vmatpush1.msra.mxu0 %v452
      %519 = vmatprep.subr.mxu0 0.0
      %520 = vmatpush1.msra.mxu0 %v453
      %521 = vmatprep.subr.mxu0 0.0
      %522 = vmatpush1.msra.mxu0 %v454
      %523 = vmatprep.subr.mxu0 0.0
      %524 = vmatpush1.msra.mxu0 %v455
      %525 = vmatprep.subr.mxu0 0.0
      %526 = vmatpush1.msra.mxu0 %v456
      %527 = vmatprep.subr.mxu0 0.0
      %528 = vmatpush1.msra.mxu0 %v457
      %529 = vmatprep.subr.mxu0 0.0
      %530 = vmatpush1.msra.mxu0 %v458
      %531 = vmatprep.subr.mxu0 0.0
      %532 = vmatpush1.msra.mxu0 %v459
      %533 = vmatprep.subr.mxu0 0.0
      %534 = vmatpush1.msra.mxu0 %v460
      %535 = vmatprep.subr.mxu0 0.0
      %536 = vmatpush1.msra.mxu0 %v461
      %537 = vmatprep.subr.mxu0 0.0
      %538 = vmatpush1.msra.mxu0 %v462
      %539 = vmatprep.subr.mxu0 0.0
      %540 = vmatpush1.msra.mxu0 %v463
      %541 = vmatprep.subr.mxu0 0.0
      %542 = vmatpush1.msra.mxu0 %v464
      %543 = vmatprep.subr.mxu0 0.0
      %544 = vmatpush1.msra.mxu0 %v465
      %545 = vmatprep.subr.mxu0 0.0
      %546 = vmatpush1.msra.mxu0 %v466
      %547 = vmatprep.subr.mxu0 0.0
      %548 = vmatpush1.msra.mxu0 %v467
      %549 = vmatprep.subr.mxu0 0.0
      %550 = vmatpush1.msra.mxu0 %v468
      %551 = vmatprep.subr.mxu0 0.0
      %552 = vmatpush1.msra.mxu0 %v469
      %553 = vmatprep.subr.mxu0 0.0
      %554 = vmatpush1.msra.mxu0 %v470
      %555 = vmatprep.subr.mxu0 0.0
      %556 = vmatpush1.msra.mxu0 %v471
      %557 = vmatprep.subr.mxu0 0.0
      %558 = vmatpush1.msra.mxu0 %v472
      %559 = vmatprep.subr.mxu0 0.0
      %560 = vmatpush1.msra.mxu0 %v473
      %561 = vmatprep.mubr.f32.mxu0 %v433
      %562 = vmatmul.mubr.f32.gmra.mrb[0].mxu0 %v426
      %v563 = vpop.f32.mrb[0].mxu0
      %v564 = vadd.f32 %v495, %v563
      %v565 = vpop.f32.mrb[0].mxu0
      %566 = vmatprep.mubr.f32.mxu0 %v432
      %567 = vmatmul.mubr.f32.gmra.mrb[0].mxu0 %v427
      %v568 = vpop.f32.mrb[0].mxu0
      %v569 = vadd.f32 %v495, %v568
      %v570 = vpop.f32.mrb[0].mxu0
      %571 = vdwg.mxu0
      %572 = vmatprep.subr.mxu0 0.0
      %573 = vmatpush1.msra.mxu0 %v474
      %574 = vmatprep.subr.mxu0 0.0
      %575 = vmatpush1.msra.mxu0 %v475
      %576 = vmatprep.subr.mxu0 0.0
      %577 = vmatpush1.msra.mxu0 %v476
      %578 = vmatprep.subr.mxu0 0.0
      %579 = vmatpush1.msra.mxu0 %v477
      %580 = vmatprep.subr.mxu0 0.0
      %581 = vmatpush1.msra.mxu0 %v478
      %582 = vmatprep.subr.mxu0 0.0
      %583 = vmatpush1.msra.mxu0 %v479
      %584 = vmatprep.subr.mxu0 0.0
      %585 = vmatpush1.msra.mxu0 %v480
      %586 = vmatprep.subr.mxu0 0.0
      %587 = vmatpush1.msra.mxu0 %v481
      %588 = vmatprep.subr.mxu0 0.0
      %589 = vmatpush1.msra.mxu0 %v482
      %590 = vmatprep.subr.mxu0 0.0
      %591 = vmatpush1.msra.mxu0 %v483
      %592 = vmatprep.subr.mxu0 0.0
      %593 = vmatpush1.msra.mxu0 %v484
      %594 = vmatprep.subr.mxu0 0.0
      %595 = vmatpush1.msra.mxu0 %v485
      %596 = vmatprep.subr.mxu0 0.0
      %597 = vmatpush1.msra.mxu0 %v486
      %598 = vmatprep.subr.mxu0 0.0
      %599 = vmatpush1.msra.mxu0 %v487
      %600 = vmatprep.subr.mxu0 0.0
      %601 = vmatpush1.msra.mxu0 %v488
      %602 = vmatprep.subr.mxu0 0.0
      %603 = vmatpush1.msra.mxu0 %v489
      %604 = vmatprep.subr.mxu0 0.0
      %605 = vmatpush1.msra.mxu0 0.0
      %606 = vmatprep.subr.mxu0 0.0
      %607 = vmatpush1.msra.mxu0 0.0
      %608 = vmatprep.subr.mxu0 0.0
      %609 = vmatpush1.msra.mxu0 0.0
      %610 = vmatprep.subr.mxu0 0.0
      %611 = vmatpush1.msra.mxu0 0.0
      %612 = vmatprep.subr.mxu0 0.0
      %613 = vmatpush1.msra.mxu0 0.0
      %614 = vmatprep.subr.mxu0 0.0
      %615 = vmatpush1.msra.mxu0 0.0
      %616 = vmatprep.subr.mxu0 0.0
      %617 = vmatpush1.msra.mxu0 0.0
      %618 = vmatprep.subr.mxu0 0.0
      %619 = vmatpush1.msra.mxu0 0.0
      %620 = vmatprep.subr.mxu0 0.0
      %621 = vmatpush1.msra.mxu0 0.0
      %622 = vmatprep.subr.mxu0 0.0
      %623 = vmatpush1.msra.mxu0 0.0
      %624 = vmatprep.subr.mxu0 0.0
      %625 = vmatpush1.msra.mxu0 0.0
      %626 = vmatprep.subr.mxu0 0.0
      %627 = vmatpush1.msra.mxu0 0.0
      %628 = vmatprep.subr.mxu0 0.0
      %629 = vmatpush1.msra.mxu0 0.0
      %630 = vmatprep.subr.mxu0 0.0
      %631 = vmatpush1.msra.mxu0 0.0
      %632 = vmatprep.subr.mxu0 0.0
      %633 = vmatpush1.msra.mxu0 0.0
      %634 = vmatprep.subr.mxu0 0.0
      %635 = vmatpush1.msra.mxu0 0.0
      %636 = vmatprep.mubr.f32.mxu0 0.0
      %637 = vmatmul.mubr.f32.gmra.mrb[0].mxu0 %v439
      %v638 = vpop.f32.mrb[0].mxu0
      %v639 = vadd.f32 %v564, %v638
      %v640 = vpop.f32.mrb[0].mxu0
      %641 = vmatprep.mubr.f32.mxu0 0.0
      %642 = vmatmul.mubr.f32.gmra.mrb[0].mxu0 %v438
      %v643 = vpop.f32.mrb[0].mxu0
      %v644 = vadd.f32 %v569, %v643
      %v645 = vpop.f32.mrb[0].mxu0
      %646 = vdwg.mxu0
      %s647 = ssub.s32 %s412, 1
      %v648 = vstv %s647
      %v649 = vadd.s32 %v648, %v415
      %v650 = vadd.s32 %v648, %v416
      %vm651 = vcmp.ge.s32.totalorder %v649, 0
      %vm652 = vcmp.ge.s32.totalorder %v650, 0
      %vm653 = vcmp.lt.s32.totalorder %v649, 16
      %vm654 = vcmp.lt.s32.totalorder %v650, 16
      %vm655 = vmand %vm651, %vm653
      %vm656 = vmand %vm652, %vm654
      %v657 = vmax.f32 %v639, 0.0
      %v658 = vmax.f32 %v644, 0.0
      %v659 = vsel %vm655, %v657, 0.0
      %v660 = vsel %vm656, %v658, 0.0
      %v663 = vrot.slane %v659, 1
      %v664 = vrot.slane %v660, 1
      %v665 = vsel %vm430, %v663, %v664
      %v667 = vrot.slane %v659, 2
      %v668 = vrot.slane %v660, 2
      %v669 = vsel %vm436, %v667, %v668
      %v671 = vld [vmem:[%s5] sm:$0xff]
      %v672 = vld [vmem:[%s5 + $0x8] sm:$0xff]
      %v673 = vld [vmem:[%s5 + $0x10] sm:$0xff]
      %v674 = vld [vmem:[%s5 + $0x18] sm:$0xff]
      %v675 = vld [vmem:[%s5 + $0x20] sm:$0xff]
      %v676 = vld [vmem:[%s5 + $0x28] sm:$0xff]
      %v677 = vld [vmem:[%s5 + $0x30] sm:$0xff]
      %v678 = vld [vmem:[%s5 + $0x38] sm:$0xff]
      %v679 = vld [vmem:[%s5 + $0x40] sm:$0xff]
      %v680 = vld [vmem:[%s5 + $0x48] sm:$0xff]
      %v681 = vld [vmem:[%s5 + $0x50] sm:$0xff]
      %v682 = vld [vmem:[%s5 + $0x58] sm:$0xff]
      %v683 = vld [vmem:[%s5 + $0x60] sm:$0xff]
      %v684 = vld [vmem:[%s5 + $0x68] sm:$0xff]
      %v685 = vld [vmem:[%s5 + $0x70] sm:$0xff]
      %v686 = vld [vmem:[%s5 + $0x78] sm:$0xff]
      %v687 = vld [vmem:[%s5 + $0x80] sm:$0xff]
      %v688 = vld [vmem:[%s5 + $0x88] sm:$0xff]
      %v689 = vld [vmem:[%s5 + $0x90] sm:$0xff]
      %v690 = vld [vmem:[%s5 + $0x98] sm:$0xff]
      %v691 = vld [vmem:[%s5 + $0xa0] sm:$0xff]
      %v692 = vld [vmem:[%s5 + $0xa8] sm:$0xff]
      %v693 = vld [vmem:[%s5 + $0xb0] sm:$0xff]
      %v694 = vld [vmem:[%s5 + $0xb8] sm:$0xff]
      %v695 = vld [vmem:[%s5 + $0xc0] sm:$0xff]
      %v696 = vld [vmem:[%s5 + $0xc8] sm:$0xff]
      %v697 = vld [vmem:[%s5 + $0xd0] sm:$0xff]
      %v698 = vld [vmem:[%s5 + $0xd8] sm:$0xff]
      %v699 = vld [vmem:[%s5 + $0xe0] sm:$0xff]
      %v700 = vld [vmem:[%s5 + $0xe8] sm:$0xff]
      %v701 = vld [vmem:[%s5 + $0xf0] sm:$0xff]
      %v702 = vld [vmem:[%s5 + $0xf8] sm:$0xff]
      %v703 = vld [vmem:[%s5 + $0x100] sm:$0xff]
      %v704 = vld [vmem:[%s5 + $0x108] sm:$0xff]
      %v705 = vld [vmem:[%s5 + $0x110] sm:$0xff]
      %v706 = vld [vmem:[%s5 + $0x118] sm:$0xff]
      %v707 = vld [vmem:[%s5 + $0x120] sm:$0xff]
      %v708 = vld [vmem:[%s5 + $0x128] sm:$0xff]
      %v709 = vld [vmem:[%s5 + $0x130] sm:$0xff]
      %v710 = vld [vmem:[%s5 + $0x138] sm:$0xff]
      %v711 = vld [vmem:[%s5 + $0x140] sm:$0xff]
      %v712 = vld [vmem:[%s5 + $0x148] sm:$0xff]
      %v713 = vld [vmem:[%s5 + $0x150] sm:$0xff]
      %v714 = vld [vmem:[%s5 + $0x158] sm:$0xff]
      %v715 = vld [vmem:[%s5 + $0x160] sm:$0xff]
      %v716 = vld [vmem:[%s5 + $0x168] sm:$0xff]
      %v717 = vld [vmem:[%s5 + $0x170] sm:$0xff]
      %v718 = vld [vmem:[%s5 + $0x178] sm:$0xff]
      %v719 = vld [vmem:[%s6] sm:$0x1]
      %v721 = vlaneseq
      %v722 = vshrl.u32 %v721, 7
      %v723 = vsub.s32 0, %v722
      %v724 = vrot.slane %v719, %v723
      %726 = vmatprep.subr.mxu0 0.0
      %727 = vmatpush1.msra.mxu0 %v671
      %728 = vmatprep.subr.mxu0 0.0
      %729 = vmatpush1.msra.mxu0 %v672
      %730 = vmatprep.subr.mxu0 0.0
      %731 = vmatpush1.msra.mxu0 %v673
      %732 = vmatprep.subr.mxu0 0.0
      %733 = vmatpush1.msra.mxu0 %v674
      %734 = vmatprep.subr.mxu0 0.0
      %735 = vmatpush1.msra.mxu0 %v675
      %736 = vmatprep.subr.mxu0 0.0
      %737 = vmatpush1.msra.mxu0 %v676
      %738 = vmatprep.subr.mxu0 0.0
      %739 = vmatpush1.msra.mxu0 %v677
      %740 = vmatprep.subr.mxu0 0.0
      %741 = vmatpush1.msra.mxu0 %v678
      %742 = vmatprep.subr.mxu0 0.0
      %743 = vmatpush1.msra.mxu0 %v679
      %744 = vmatprep.subr.mxu0 0.0
      %745 = vmatpush1.msra.mxu0 %v680
      %746 = vmatprep.subr.mxu0 0.0
      %747 = vmatpush1.msra.mxu0 %v681
      %748 = vmatprep.subr.mxu0 0.0
      %749 = vmatpush1.msra.mxu0 %v682
      %750 = vmatprep.subr.mxu0 0.0
      %751 = vmatpush1.msra.mxu0 %v683
      %752 = vmatprep.subr.mxu0 0.0
      %753 = vmatpush1.msra.mxu0 %v684
      %754 = vmatprep.subr.mxu0 0.0
      %755 = vmatpush1.msra.mxu0 %v685
      %756 = vmatprep.subr.mxu0 0.0
      %757 = vmatpush1.msra.mxu0 %v686
      %758 = vmatprep.subr.mxu0 0.0
      %759 = vmatpush1.msra.mxu0 %v687
      %760 = vmatprep.subr.mxu0 0.0
      %761 = vmatpush1.msra.mxu0 %v688
      %762 = vmatprep.subr.mxu0 0.0
      %763 = vmatpush1.msra.mxu0 %v689
      %764 = vmatprep.subr.mxu0 0.0
      %765 = vmatpush1.msra.mxu0 %v690
      %766 = vmatprep.subr.mxu0 0.0
      %767 = vmatpush1.msra.mxu0 %v691
      %768 = vmatprep.subr.mxu0 0.0
      %769 = vmatpush1.msra.mxu0 %v692
      %770 = vmatprep.subr.mxu0 0.0
      %771 = vmatpush1.msra.mxu0 %v693
      %772 = vmatprep.subr.mxu0 0.0
      %773 = vmatpush1.msra.mxu0 %v694
      %774 = vmatprep.subr.mxu0 0.0
      %775 = vmatpush1.msra.mxu0 %v695
      %776 = vmatprep.subr.mxu0 0.0
      %777 = vmatpush1.msra.mxu0 %v696
      %778 = vmatprep.subr.mxu0 0.0
      %779 = vmatpush1.msra.mxu0 %v697
      %780 = vmatprep.subr.mxu0 0.0
      %781 = vmatpush1.msra.mxu0 %v698
      %782 = vmatprep.subr.mxu0 0.0
      %783 = vmatpush1.msra.mxu0 %v699
      %784 = vmatprep.subr.mxu0 0.0
      %785 = vmatpush1.msra.mxu0 %v700
      %786 = vmatprep.subr.mxu0 0.0
      %787 = vmatpush1.msra.mxu0 %v701
      %788 = vmatprep.subr.mxu0 0.0
      %789 = vmatpush1.msra.mxu0 %v702
      %790 = vmatprep.mubr.f32.mxu0 %v665
      %791 = vmatmul.mubr.f32.gmra.mrb[0].mxu0 %v659
      %v792 = vpop.f32.mrb[0].mxu0
      %v793 = vadd.f32 %v724, %v792
      %v794 = vpop.f32.mrb[0].mxu0
      %795 = vdwg.mxu0
      %796 = vmatprep.subr.mxu0 0.0
      %797 = vmatpush1.msra.mxu0 %v703
      %798 = vmatprep.subr.mxu0 0.0
      %799 = vmatpush1.msra.mxu0 %v704
      %800 = vmatprep.subr.mxu0 0.0
      %801 = vmatpush1.msra.mxu0 %v705
      %802 = vmatprep.subr.mxu0 0.0
      %803 = vmatpush1.msra.mxu0 %v706
      %804 = vmatprep.subr.mxu0 0.0
      %805 = vmatpush1.msra.mxu0 %v707
      %806 = vmatprep.subr.mxu0 0.0
      %807 = vmatpush1.msra.mxu0 %v708
      %808 = vmatprep.subr.mxu0 0.0
      %809 = vmatpush1.msra.mxu0 %v709
      %810 = vmatprep.subr.mxu0 0.0
      %811 = vmatpush1.msra.mxu0 %v710
      %812 = vmatprep.subr.mxu0 0.0
      %813 = vmatpush1.msra.mxu0 %v711
      %814 = vmatprep.subr.mxu0 0.0
      %815 = vmatpush1.msra.mxu0 %v712
      %816 = vmatprep.subr.mxu0 0.0
      %817 = vmatpush1.msra.mxu0 %v713
      %818 = vmatprep.subr.mxu0 0.0
      %819 = vmatpush1.msra.mxu0 %v714
      %820 = vmatprep.subr.mxu0 0.0
      %821 = vmatpush1.msra.mxu0 %v715
      %822 = vmatprep.subr.mxu0 0.0
      %823 = vmatpush1.msra.mxu0 %v716
      %824 = vmatprep.subr.mxu0 0.0
      %825 = vmatpush1.msra.mxu0 %v717
      %826 = vmatprep.subr.mxu0 0.0
      %827 = vmatpush1.msra.mxu0 %v718
      %828 = vmatprep.subr.mxu0 0.0
      %829 = vmatpush1.msra.mxu0 0.0
      %830 = vmatprep.subr.mxu0 0.0
      %831 = vmatpush1.msra.mxu0 0.0
      %832 = vmatprep.subr.mxu0 0.0
      %833 = vmatpush1.msra.mxu0 0.0
      %834 = vmatprep.subr.mxu0 0.0
      %835 = vmatpush1.msra.mxu0 0.0
      %836 = vmatprep.subr.mxu0 0.0
      %837 = vmatpush1.msra.mxu0 0.0
      %838 = vmatprep.subr.mxu0 0.0
      %839 = vmatpush1.msra.mxu0 0.0
      %840 = vmatprep.subr.mxu0 0.0
      %841 = vmatpush1.msra.mxu0 0.0
      %842 = vmatprep.subr.mxu0 0.0
      %843 = vmatpush1.msra.mxu0 0.0
      %844 = vmatprep.subr.mxu0 0.0
      %845 = vmatpush1.msra.mxu0 0.0
      %846 = vmatprep.subr.mxu0 0.0
      %847 = vmatpush1.msra.mxu0 0.0
      %848 = vmatprep.subr.mxu0 0.0
      %849 = vmatpush1.msra.mxu0 0.0
      %850 = vmatprep.subr.mxu0 0.0
      %851 = vmatpush1.msra.mxu0 0.0
      %852 = vmatprep.subr.mxu0 0.0
      %853 = vmatpush1.msra.mxu0 0.0
      %854 = vmatprep.subr.mxu0 0.0
      %855 = vmatpush1.msra.mxu0 0.0
      %856 = vmatprep.subr.mxu0 0.0
      %857 = vmatpush1.msra.mxu0 0.0
      %858 = vmatprep.subr.mxu0 0.0
      %859 = vmatpush1.msra.mxu0 0.0
      %860 = vmatprep.mubr.f32.mxu0 0.0
      %861 = vmatmul.mubr.f32.gmra.mrb[0].mxu0 %v669
      %v862 = vpop.f32.mrb[0].mxu0
      %v863 = vadd.f32 %v793, %v862
      %v864 = vpop.f32.mrb[0].mxu0
      %865 = vdwg.mxu0
      %v866 = vadd.f32 %v863, %v439
      %v867 = vmax.f32 %v866, 0.0
      %v869 = vcombine.high %v867, %v867
      %v871 = vunpack.c.l.s4 1983009808
      %v872 = vunpack.c.0.s8 %v871
      %v873 = vlaneseq
      %v874 = vshrl.u32 %v873, 7
      %v875 = vsub.s32 %v872, %v874
      %v876 = vrot.slane %v867, %v875
      %v878 = vunpack.c.l.s4 1983009808
      %v879 = vunpack.c.0.s8 %v878
      %v880 = vlaneseq
      %v881 = vshrl.u32 %v880, 7
      %v882 = vsub.s32 %v879, %v881
      %v883 = vrot.slane %v869, %v882
      %v884 = vcombine.high %v876, %v876
      %v885 = vcombine.high %v883, %v883
      %v890 = vrot.slane %v876, 7
      %v891 = vrot.slane %v890, 2
      %v892 = vrot.slane %v884, 7
      %v893 = vrot.slane %v892, 2
      %v894 = vrot.slane %v883, 7
      %v895 = vrot.slane %v894, 2
      %v896 = vrot.slane %v885, 7
      %v897 = vrot.slane %v896, 2
      %v902 = vmax.f32 %v876, %v891
      %v903 = vmax.f32 %v884, %v893
      %v904 = vmax.f32 %v883, %v895
      %v905 = vmax.f32 %v885, %v897
      %910 = vrot.lane.b32.xlu0 %v902, 64
      %v911 = vpop.permute.xlu0 %910
      %912 = vrot.lane.b32.xlu0 %v903, 64
      %v913 = vpop.permute.xlu0 %912
      %914 = vrot.lane.b32.xlu0 %v904, 64
      %v915 = vpop.permute.xlu0 %914
      %916 = vrot.lane.b32.xlu0 %v905, 64
      %v917 = vpop.permute.xlu0 %916
      %v922 = vmax.f32 %v902, %v911
      %v923 = vmax.f32 %v903, %v913
      %v924 = vmax.f32 %v904, %v915
      %v925 = vmax.f32 %v905, %v917
      %v930 = vlaneseq
      %v931 = vshrl.u32 %v930, 7
      %v932 = vsub.s32 0, %v931
      %v933 = vrot.slane %v922, %v932
      %v934 = vlaneseq
      %v935 = vshrl.u32 %v934, 7
      %v936 = vsub.s32 0, %v935
      %v937 = vrot.slane %v923, %v936
      %v938 = vlaneseq
      %v939 = vshrl.u32 %v938, 7
      %v940 = vsub.s32 0, %v939
      %v941 = vrot.slane %v924, %v940
      %v942 = vlaneseq
      %v943 = vshrl.u32 %v942, 7
      %v944 = vsub.s32 0, %v943
      %v945 = vrot.slane %v925, %v944
      %vm946 = vcmask 1041409
      %v947 = vsel %vm946, %v937, %v933
      %vm948 = vcmask 1042434
      %v949 = vsel %vm948, %v941, %v947
      %vm950 = vcmask 1043459
      %v951 = vsel %vm950, %v945, %v949
      %vm953 = vcmask 519168
      %954 = vst.msk [vmem:[%s312] sm:$0xf] %vm953, %v951
      %p955 = scmp.lt.s32.totalorder %s22, 1
      %s956 = scalar_select %p955, %s22, 1
      %p957 = scmp.lt.s32.totalorder %s23, 1
      %s958 = scalar_select %p957, %s23, 1
      %s959 = smul.addr %s956, 2
      %s960 = sadd.s32 %s958, %s959
      %s961 = smul.addr %s960, 4
      %s962 = scalar_lea.vmem %s7, %s961
      // Predicated region
      $region49: #{_lambda_.1} parent=47 // pred_check
        %p963 = pneg %p204
      $region50: #{_lambda_.1} parent=47 // pred_check_branch
        %965 = sbr.rel (%p963) target = $region52
      $region51: #{_lambda_.1} parent=47 // pred_region
        _
      $region52: #{_lambda_.1} parent=47 // pred_fallthru
        _
    $region48: #{_lambda_.1} parent=5 // pred_fallthru
      _
    %p966 = scmp.le.s32.totalorder 2, %s13
    // Predicated region
    $region53: #{_lambda_.1} parent=5 // pred_check
      %p967 = pneg %p966
    $region54: #{_lambda_.1} parent=5 // pred_check_branch
      %969 = sbr.rel (%p967) target = $region56
    $region55: #{_lambda_.1} parent=5 // pred_region
      %s970 = ssub.s32 %s13, 2
      // Predicated region
      $region57: #{_lambda_.1} parent=55 // pred_check
        %p971 = pneg %p210
      $region58: #{_lambda_.1} parent=55 // pred_check_branch
        %973 = sbr.rel (%p971) target = $region60
      $region59: #{_lambda_.1} parent=55 // pred_region
        %p974 = scmp.lt.s32.totalorder %s24, 1
        %s975 = scalar_select %p974, %s24, 1
        %p976 = scmp.lt.s32.totalorder %s25, 1
        %s977 = scalar_select %p976, %s25, 1
        %s978 = smul.addr %s975, 2
        %s979 = sadd.s32 %s977, %s978
        %s980 = smul.addr %s979, 4
        %s981 = scalar_lea.vmem %s7, %s980
      $region60: #{_lambda_.1} parent=55 // pred_fallthru
        _
    $region56: #{_lambda_.1} parent=5 // pred_fallthru
      _
  $region6: #{_lambda_.1} parent=0 // loop_footer
    %s17 = sadd.s32 1, %s13
  $region7: #{_lambda_.1} parent=0 // loop_footer_branch
    %12 = sbr.rel target = $region3
  $region8: #{_lambda_.1} parent=0 // loop_exit
    _

</llo_original>
